<compile_context>
chip_gen: v6e
topology: v6e:2x2x1
jax: 0.10.0
libtpu: 0.0.40
codegen_flags: <defaults>
</compile_context>

<pallas_src>
import math

import jax
import jax.numpy as jnp
from jax.experimental import pallas as pl
from jax.experimental.pallas import tpu as pltpu


LANE = 128
SUBLANE = 8
# Max rows of the [M, 128] f32 slab processed per grid step.
# (1024, 128) f32 block = 512 KiB; 6 blocks live (3 in + 3 out) x 2 buffers
# -> ~6 MiB VMEM, comfortably inside every generation's scoped limit.
MAX_TILE_ROWS = 1024


def _round_up(n, m):
    return ((n + m - 1) // m) * m


def _make_lif_kernel(tau_m, tau_s, threshold, reset_value, dt):
    k_s = float(dt) / float(tau_s)
    k_m = float(dt) / float(tau_m)
    thr = float(threshold)
    rst = float(reset_value)

    def lif_kernel(x_ref, v_ref, i_ref, spike_ref, v_out_ref, i_out_ref):
        x = x_ref[...]
        i_prev = i_ref[...]
        v_prev = v_ref[...]

        # synaptic current update
        i_new = i_prev + (x - i_prev) * k_s
        # membrane potential update
        v_new = v_prev + (rst - v_prev + i_new) * k_m
        # spike + reset (single vselect per output)
        fired = v_new >= thr
        spike_ref[...] = jnp.where(fired, 1.0, 0.0).astype(spike_ref.dtype)
        v_out_ref[...] = jnp.where(fired, rst, v_new).astype(v_out_ref.dtype)
        i_out_ref[...] = i_new

    return lif_kernel


def _lif_step_slab(x2d, v2d, i2d, *, tau_m, tau_s, threshold, reset_value, dt,
                   tile_rows):
    """x2d/v2d/i2d: [M, 128] float32 slabs, M a multiple of tile_rows."""
    M, N = x2d.shape
    assert N == LANE and M % tile_rows == 0 and tile_rows % SUBLANE == 0

    kernel = _make_lif_kernel(tau_m, tau_s, threshold, reset_value, dt)
    spec = pl.BlockSpec((tile_rows, LANE), lambda m: (m, 0))
    out_shape = tuple(
        jax.ShapeDtypeStruct((M, N), jnp.float32) for _ in range(3)
    )  # spike, v, i

    return pl.pallas_call(
        kernel,
        out_shape=out_shape,
        grid_spec=pltpu.PrefetchScalarGridSpec(
            num_scalar_prefetch=0,
            grid=(M // tile_rows,),
            in_specs=[spec, spec, spec],
            out_specs=[spec, spec, spec],
        ),
        # v and i are state: write them back into their own HBM buffers.
        input_output_aliases={1: 1, 2: 2},
        compiler_params=pltpu.CompilerParams(
            dimension_semantics=("parallel",),
        ),
    )(x2d, v2d, i2d)


class LIFNeuron:
    """JAX/Pallas port of the stateful PyTorch LIFNeuron.

    State (v, i) is kept resident in a padded, lane-dense [M, 128] float32
    slab between calls; only the per-call outputs are reshaped back to the
    user-facing shape.
    """

    def __init__(self, tau_m=10.0, tau_s=5.0, threshold=1.0, reset_value=0.0):
        self.tau_m = float(tau_m)
        self.tau_s = float(tau_s)
        self.threshold = float(threshold)
        self.reset_value = float(reset_value)
        self._v_slab = None
        self._i_slab = None
        self._meta = None          # (orig_shape, total, M)
        self._step_cache = {}      # (shape, dtype, dt) -> (jitted step, M, total)

    # -- build one fused (pad + kernel + unpack) jitted step per config -------
    def _build_step(self, orig_shape, dt):
        total = int(math.prod(orig_shape)) if orig_shape else 1
        rows = _round_up(max(total, 1), LANE) // LANE
        rows = _round_up(rows, SUBLANE)
        tile_rows = min(MAX_TILE_ROWS, rows)
        M = _round_up(rows, tile_rows)
        pad = M * LANE - total

        params = dict(
            tau_m=self.tau_m, tau_s=self.tau_s, threshold=self.threshold,
            reset_value=self.reset_value, dt=float(dt), tile_rows=tile_rows,
        )

        def step(x, v_slab, i_slab):
            xf = x.astype(jnp.float32).reshape(-1)
            if pad:
                xf = jnp.pad(xf, (0, pad))
            x2d = xf.reshape(M, LANE)

            spike2d, v2d, i2d = _lif_step_slab(x2d, v_slab, i_slab, **params)

            def unslab(a2d):
                return a2d.reshape(-1)[:total].reshape(orig_shape)

            return unslab(spike2d), unslab(v2d), v2d, i2d

        # Donate the state slabs so XLA can honour the in-place aliasing.
        return jax.jit(step, donate_argnums=(1, 2)), M, total

    def __call__(self, x, dt=1.0):
        orig_shape = tuple(x.shape)
        key = (orig_shape, jnp.dtype(x.dtype).name, float(dt))
        if key not in self._step_cache:
            self._step_cache[key] = self._build_step(orig_shape, dt)
        step_fn, M, total = self._step_cache[key]

        if self._v_slab is None:
            self._v_slab = jnp.zeros((M, LANE), jnp.float32)
            self._i_slab = jnp.zeros((M, LANE), jnp.float32)
            self._meta = (orig_shape, total, M)
        else:
            assert self._meta[0] == orig_shape, "input shape changed mid-sequence"

        spike, v, self._v_slab, self._i_slab = step_fn(
            x, self._v_slab, self._i_slab
        )
        return spike, v

    # -- state views in the user-facing shape (float32) -----------------------
    def _unslab_state(self, slab):
        orig_shape, total, _ = self._meta
        return slab.reshape(-1)[:total].reshape(orig_shape)

    @property
    def v(self):
        return None if self._v_slab is None else self._unslab_state(self._v_slab)

    @property
    def i(self):
        return None if self._i_slab is None else self._unslab_state(self._i_slab)


def _reference_lif(x, v, i, tau_m, tau_s, threshold, reset_value, dt):
    i_new = i + (-i + x) * (dt / tau_s)
    v_new = v + (reset_value - v + i_new) * (dt / tau_m)
    spike = (v_new >= threshold).astype(jnp.float32)
    v_reset = (1 - spike) * v_new + spike * reset_value
    return spike, v_reset, i_new


if __name__ == "__main__":
    # --- small NCHW-like input, a few stateful timesteps ---------------------
    key = jax.random.PRNGKey(0)
    B, C, H, W = 2, 4, 16, 16
    # scale input so some neurons actually cross threshold over a few steps
    x = jax.random.uniform(key, (B, C, H, W), jnp.float32, minval=0.0, maxval=20.0)

    neuron = LIFNeuron(tau_m=10.0, tau_s=5.0, threshold=1.0, reset_value=0.0)
    v_ref = jnp.zeros_like(x)
    i_ref = jnp.zeros_like(x)
    for _ in range(3):
        spike, v = neuron(x, dt=1.0)
        spike_ref, v_ref, i_ref = _reference_lif(
            x, v_ref, i_ref, 10.0, 5.0, 1.0, 0.0, 1.0
        )

    spike = jax.block_until_ready(spike)
    v = jax.block_until_ready(v)

    assert spike.shape == x.shape and v.shape == x.shape
    assert jnp.allclose(spike, spike_ref, atol=1e-5), "spike mismatch"
    assert jnp.allclose(v, v_ref, atol=1e-5), "membrane potential mismatch"
    assert jnp.allclose(neuron.i, i_ref, atol=1e-5), "current mismatch"
    assert float(jnp.sum(spike)) > 0.0, "expected at least one spike"

    # --- larger input that exercises a multi-block grid ----------------------
    B2, C2, H2, W2 = 8, 8, 32, 128   # 262144 elems -> 2048 slab rows -> grid=(2,)
    x2 = jax.random.uniform(jax.random.PRNGKey(1), (B2, C2, H2, W2),
                            jnp.float32, minval=0.0, maxval=20.0)
    neuron2 = LIFNeuron()
    spike2, v2 = neuron2(x2, dt=1.0)
    s2_ref, v2_ref, i2_ref = _reference_lif(
        x2, jnp.zeros_like(x2), jnp.zeros_like(x2), 10.0, 5.0, 1.0, 0.0, 1.0
    )
    spike2 = jax.block_until_ready(spike2)
    assert jnp.allclose(spike2, s2_ref, atol=1e-5), "spike mismatch (big)"
    assert jnp.allclose(v2, v2_ref, atol=1e-5), "voltage mismatch (big)"
    assert jnp.allclose(neuron2.i, i2_ref, atol=1e-5), "current mismatch (big)"

    print("KERNEL_OK")
</pallas_src>

<mosaic_0001>
module attributes {stable_mosaic.version = 11 : i64} {
  func.func @lif_kernel(%arg0: i32, %arg1: memref<16x128xf32, #tpu.memory_space<vmem>>, %arg2: memref<16x128xf32, #tpu.memory_space<vmem>>, %arg3: memref<16x128xf32, #tpu.memory_space<vmem>>, %arg4: memref<16x128xf32, #tpu.memory_space<vmem>>, %arg5: memref<16x128xf32, #tpu.memory_space<vmem>>, %arg6: memref<16x128xf32, #tpu.memory_space<vmem>>) attributes {dimension_semantics = [#tpu.dimension_semantics<parallel>], iteration_bounds = array<i64: 1>, scalar_prefetch = 0 : i64, scratch_operands = 0 : i64, tpu.core_type = #tpu.core_type<tc>, window_params = [{transform_indices = @transform_0, window_bounds = array<i64: 16, 128>}, {transform_indices = @transform_1, window_bounds = array<i64: 16, 128>}, {transform_indices = @transform_2, window_bounds = array<i64: 16, 128>}, {transform_indices = @transform_3, window_bounds = array<i64: 16, 128>}, {transform_indices = @transform_4, window_bounds = array<i64: 16, 128>}, {transform_indices = @transform_5, window_bounds = array<i64: 16, 128>}]} {
    %c0 = arith.constant 0 : index
    %c0_0 = arith.constant 0 : index
    %0 = vector.load %arg1[%c0, %c0_0] : memref<16x128xf32, #tpu.memory_space<vmem>>, vector<16x128xf32>
    %c0_1 = arith.constant 0 : index
    %c0_2 = arith.constant 0 : index
    %1 = vector.load %arg3[%c0_1, %c0_2] : memref<16x128xf32, #tpu.memory_space<vmem>>, vector<16x128xf32>
    %c0_3 = arith.constant 0 : index
    %c0_4 = arith.constant 0 : index
    %2 = vector.load %arg2[%c0_3, %c0_4] : memref<16x128xf32, #tpu.memory_space<vmem>>, vector<16x128xf32>
    %3 = arith.subf %0, %1 : vector<16x128xf32>
    %cst = arith.constant 2.000000e-01 : f32
    %4 = vector.broadcast %cst : f32 to vector<16x128xf32>
    %5 = arith.mulf %3, %4 : vector<16x128xf32>
    %6 = arith.addf %1, %5 : vector<16x128xf32>
    %cst_5 = arith.constant 0.000000e+00 : f32
    %7 = vector.broadcast %cst_5 : f32 to vector<16x128xf32>
    %8 = arith.subf %7, %2 : vector<16x128xf32>
    %9 = arith.addf %8, %6 : vector<16x128xf32>
    %cst_6 = arith.constant 1.000000e-01 : f32
    %10 = vector.broadcast %cst_6 : f32 to vector<16x128xf32>
    %11 = arith.mulf %9, %10 : vector<16x128xf32>
    %12 = arith.addf %2, %11 : vector<16x128xf32>
    %cst_7 = arith.constant 1.000000e+00 : f32
    %13 = vector.broadcast %cst_7 : f32 to vector<16x128xf32>
    %14 = arith.cmpf oge, %12, %13 : vector<16x128xf32>
    %cst_8 = arith.constant 1.000000e+00 : f32
    %cst_9 = arith.constant 0.000000e+00 : f32
    %15 = vector.broadcast %cst_8 : f32 to vector<16x128xf32>
    %16 = vector.broadcast %cst_9 : f32 to vector<16x128xf32>
    %17 = arith.select %14, %15, %16 : vector<16x128xi1>, vector<16x128xf32>
    %c0_10 = arith.constant 0 : index
    %c0_11 = arith.constant 0 : index
    %18 = vector.load %arg4[%c0_10, %c0_11] : memref<16x128xf32, #tpu.memory_space<vmem>>, vector<16x128xf32>
    tpu.vector_store %arg4[%c0_10, %c0_11], %17 {strides = array<i32>} : memref<16x128xf32, #tpu.memory_space<vmem>>, vector<16x128xf32>,
    %cst_12 = arith.constant 0.000000e+00 : f32
    %19 = vector.broadcast %cst_12 : f32 to vector<16x128xf32>
    %20 = arith.select %14, %19, %12 : vector<16x128xi1>, vector<16x128xf32>
    %c0_13 = arith.constant 0 : index
    %c0_14 = arith.constant 0 : index
    %21 = vector.load %arg5[%c0_13, %c0_14] : memref<16x128xf32, #tpu.memory_space<vmem>>, vector<16x128xf32>
    tpu.vector_store %arg5[%c0_13, %c0_14], %20 {strides = array<i32>} : memref<16x128xf32, #tpu.memory_space<vmem>>, vector<16x128xf32>,
    %c0_15 = arith.constant 0 : index
    %c0_16 = arith.constant 0 : index
    %22 = vector.load %arg6[%c0_15, %c0_16] : memref<16x128xf32, #tpu.memory_space<vmem>>, vector<16x128xf32>
    tpu.vector_store %arg6[%c0_15, %c0_16], %6 {strides = array<i32>} : memref<16x128xf32, #tpu.memory_space<vmem>>, vector<16x128xf32>,
    return
  }
  func.func @transform_0(%arg0: i32) -> (i32, i32) {
    %c0_i32 = arith.constant 0 : i32
    %c0_i32_0 = arith.constant 0 : i32
    return %arg0, %c0_i32 : i32, i32
  }
  func.func @transform_1(%arg0: i32) -> (i32, i32) {
    %c0_i32 = arith.constant 0 : i32
    %c0_i32_0 = arith.constant 0 : i32
    return %arg0, %c0_i32 : i32, i32
  }
  func.func @transform_2(%arg0: i32) -> (i32, i32) {
    %c0_i32 = arith.constant 0 : i32
    %c0_i32_0 = arith.constant 0 : i32
    return %arg0, %c0_i32 : i32, i32
  }
  func.func @transform_3(%arg0: i32) -> (i32, i32) {
    %c0_i32 = arith.constant 0 : i32
    %c0_i32_0 = arith.constant 0 : i32
    return %arg0, %c0_i32 : i32, i32
  }
  func.func @transform_4(%arg0: i32) -> (i32, i32) {
    %c0_i32 = arith.constant 0 : i32
    %c0_i32_0 = arith.constant 0 : i32
    return %arg0, %c0_i32 : i32, i32
  }
  func.func @transform_5(%arg0: i32) -> (i32, i32) {
    %c0_i32 = arith.constant 0 : i32
    %c0_i32_0 = arith.constant 0 : i32
    return %arg0, %c0_i32 : i32, i32
  }
}

</mosaic_0001>

<llo_original>
// kernel: step.1
$region0: #{step.1}
  #allocation0 [shape = 'u32[]', space=smem, size = 0x4, offset = 0x4, fixed_abs, tag = 'smem constant byte address 0x4 - core index']
  #allocation1 [shape = 'u32[144,128]{1,0:T(1,128)}', space=vmem, size = 0x12000, scoped, tag = 'internal scratch']
  %s0 = inlined_call_operand.vmem [shape: f32[16,128], index: 0, kind: input, shape index: {}]
  %s1 = inlined_call_operand.vmem [shape: f32[16,128], index: 1, kind: input, shape index: {}, may-alias: {1,4}]
  %s2 = inlined_call_operand.vmem [shape: f32[16,128], index: 2, kind: input, shape index: {}, may-alias: {2,5}]
  %s3 = inlined_call_operand.vmem [shape: f32[16,128], index: 3, kind: output, shape index: {0}]
  %s4 = inlined_call_operand.vmem [shape: f32[16,128], index: 4, kind: output, shape index: {1}, may-alias: {1,4}]
  %s5 = inlined_call_operand.vmem [shape: f32[16,128], index: 5, kind: output, shape index: {2}, may-alias: {2,5}]
  %6 = xla_tuple %s3, %s4, %s5
  %s7 = sld [smem:[#allocation0]]
  $region38: #{step.1} parent=0
    _
  %s9 = ssub.s32 1, %s7
  %s10 = scalar_select 0, %s9, %s7
  // Predicated region
  $region2: #{step.1} parent=0 // pred_check
    _
  $region3: #{step.1} parent=0 // pred_check_branch
    %12 = sbr.rel (0) target = $region5
  $region4: #{step.1} parent=0 // pred_region
    _
  $region5: #{step.1} parent=0 // pred_fallthru
    _
  // Predicated region
  $region6: #{step.1} parent=0 // pred_check
    _
  $region7: #{step.1} parent=0 // pred_check_branch
    %14 = sbr.rel (0) target = $region9
  $region8: #{step.1} parent=0 // pred_region
    _
  $region9: #{step.1} parent=0 // pred_fallthru
    _
  // Predicated region
  $region10: #{step.1} parent=0 // pred_check
    _
  $region11: #{step.1} parent=0 // pred_check_branch
    %16 = sbr.rel (0) target = $region13
  $region12: #{step.1} parent=0 // pred_region
    _
  $region13: #{step.1} parent=0 // pred_fallthru
    _
  %v17 = vld [vmem:[%s0] sm:$0xff]
  %v18 = vld [vmem:[%s0 + $0x8] sm:$0xff]
  %v19 = vld [vmem:[%s2] sm:$0xff]
  %v20 = vld [vmem:[%s2 + $0x8] sm:$0xff]
  %v21 = vld [vmem:[%s1] sm:$0xff]
  %v22 = vld [vmem:[%s1 + $0x8] sm:$0xff]
  %v23 = vsub.f32 %v17, %v19
  %v24 = vsub.f32 %v18, %v20
  %v25 = vmul.f32 %v23, 0.2
  %v26 = vmul.f32 %v24, 0.2
  %v27 = vadd.f32 %v19, %v25
  %v28 = vadd.f32 %v20, %v26
  %v29 = vsub.f32 0.0, %v21
  %v30 = vsub.f32 0.0, %v22
  %v31 = vadd.f32 %v29, %v27
  %v32 = vadd.f32 %v30, %v28
  %v33 = vmul.f32 %v31, 0.1
  %v34 = vmul.f32 %v32, 0.1
  %v35 = vadd.f32 %v21, %v33
  %v36 = vadd.f32 %v22, %v34
  %vm37 = vcmp.ge.f32.partialorder %v35, 1.0
  %vm38 = vcmp.ge.f32.partialorder %v36, 1.0
  %v39 = vsel %vm37, 1.0, 0.0
  %v40 = vsel %vm38, 1.0, 0.0
  %41 = vst [vmem:[%s3] sm:$0xff] %v39
  %42 = vst [vmem:[%s3 + $0x8] sm:$0xff] %v40
  %v43 = vsel %vm37, 0.0, %v35
  %v44 = vsel %vm38, 0.0, %v36
  %45 = vst [vmem:[%s4] sm:$0xff] %v43
  %46 = vst [vmem:[%s4 + $0x8] sm:$0xff] %v44
  %47 = vst [vmem:[%s5] sm:$0xff] %v27
  %48 = vst [vmem:[%s5 + $0x8] sm:$0xff] %v28
  // Predicated region
  $region14: #{step.1} parent=0 // pred_check
    _
  $region15: #{step.1} parent=0 // pred_check_branch
    %50 = sbr.rel (0) target = $region17
  $region16: #{step.1} parent=0 // pred_region
    _
  $region17: #{step.1} parent=0 // pred_fallthru
    _
  // Predicated region
  $region18: #{step.1} parent=0 // pred_check
    _
  $region19: #{step.1} parent=0 // pred_check_branch
    %52 = sbr.rel (0) target = $region21
  $region20: #{step.1} parent=0 // pred_region
    _
  $region21: #{step.1} parent=0 // pred_fallthru
    _
  // Predicated region
  $region22: #{step.1} parent=0 // pred_check
    _
  $region23: #{step.1} parent=0 // pred_check_branch
    %54 = sbr.rel (0) target = $region25
  $region24: #{step.1} parent=0 // pred_region
    _
  $region25: #{step.1} parent=0 // pred_fallthru
    _
  // Predicated region
  $region26: #{step.1} parent=0 // pred_check
    _
  $region27: #{step.1} parent=0 // pred_check_branch
    %56 = sbr.rel (0) target = $region29
  $region28: #{step.1} parent=0 // pred_region
    _
  $region29: #{step.1} parent=0 // pred_fallthru
    _
  // Predicated region
  $region30: #{step.1} parent=0 // pred_check
    _
  $region31: #{step.1} parent=0 // pred_check_branch
    %58 = sbr.rel (0) target = $region33
  $region32: #{step.1} parent=0 // pred_region
    _
  $region33: #{step.1} parent=0 // pred_fallthru
    _
  // Predicated region
  $region34: #{step.1} parent=0 // pred_check
    _
  $region35: #{step.1} parent=0 // pred_check_branch
    %60 = sbr.rel (0) target = $region37
  $region36: #{step.1} parent=0 // pred_region
    _
  $region37: #{step.1} parent=0 // pred_fallthru
    _

</llo_original>
